<compile_context>
chip_gen: v6e
topology: v6e:2x2x1
jax: 0.10.0
libtpu: 0.0.40
codegen_flags: <defaults>
</compile_context>

<pallas_src>
import functools

import jax
import jax.numpy as jnp
from jax.experimental import pallas as pl
from jax.experimental.pallas import tpu as pltpu


# ---------------------------------------------------------------------------
# Kernel body
# ---------------------------------------------------------------------------
def _agg_kernel(x_ref, o_ref, acc_ref, *, reduction, total_t, tile_t,
                chunked, need_mask, acc_init, group):
    """grid = (b_tiles, t_tiles); acc_ref is (tile_b, 8|1, H) VMEM scratch."""
    t = pl.program_id(1)
    nt = pl.num_programs(1)
    acc_dtype = acc_ref.dtype

    def combine(a, b):
        return jnp.maximum(a, b) if reduction == "max" else a + b

    @pl.when(t == 0)
    def _init():
        acc_ref[...] = jnp.full(acc_ref.shape, acc_init, dtype=acc_dtype)

    if chunked:
        n_chunks = tile_t // 8

        def load(start):
            start = pl.multiple_of(start, 8)
            return x_ref[:, pl.ds(start, 8), :].astype(acc_dtype)  # (tb,8,H)

        def run_unmasked():
            # Grouped accumulation: `group` chunks tree-combined in vregs,
            # then a single accumulator read-modify-write per group.
            n_groups = n_chunks // group
            unroll = min(n_groups, 8)

            def body(j, carry):
                base = j * (8 * group)
                vals = [load(base + g * 8) for g in range(group)]
                while len(vals) > 1:
                    nxt = [combine(vals[i], vals[i + 1])
                           for i in range(0, len(vals) - 1, 2)]
                    if len(vals) % 2:
                        nxt.append(vals[-1])
                    vals = nxt
                acc_ref[...] = combine(acc_ref[...], vals[0])
                return carry

            jax.lax.fori_loop(0, n_groups, body, 0, unroll=unroll)

        if need_mask:
            # Interior T tiles: cheap unmasked path (no iota / compare / select).
            @pl.when(t != nt - 1)
            def _interior():
                run_unmasked()

            # Final (ragged) T tile only: masked loop, iota hoisted out of the
            # loop body and reused across chunks.
            @pl.when(t == nt - 1)
            def _tail():
                row_iota = jax.lax.broadcasted_iota(
                    jnp.int32,
                    (acc_ref.shape[0], 8, acc_ref.shape[2]), 1)
                tile_base = t * tile_t
                fill = jnp.asarray(acc_init, dtype=acc_dtype)
                unroll = min(n_chunks, 8)

                def body(j, carry):
                    start = j * 8
                    x = load(start)
                    rows = tile_base + start + row_iota
                    x = jnp.where(rows < total_t, x, fill)
                    acc_ref[...] = combine(acc_ref[...], x)
                    return carry

                jax.lax.fori_loop(0, n_chunks, body, 0, unroll=unroll)
        else:
            run_unmasked()
    else:
        # Small-T fallback (T < 8 or tile_t == T not a multiple of 8):
        # single in-tile sublane reduce; negligible at these sizes.
        x = x_ref[...].astype(acc_dtype)  # (tile_b, tile_t, H)
        if reduction == "max":
            acc_ref[...] = jnp.maximum(acc_ref[...],
                                       jnp.max(x, axis=1, keepdims=True))
        else:
            acc_ref[...] = acc_ref[...] + jnp.sum(x, axis=1, keepdims=True)

    @pl.when(t == nt - 1)
    def _finalize():
        a = acc_ref[...]
        if reduction == "max":
            res = jnp.max(a, axis=1)    # one-time 8-row XLU reduce
        else:
            res = jnp.sum(a, axis=1)
        if reduction == "mean":
            res = res * (1.0 / float(total_t))
        o_ref[...] = res.astype(o_ref.dtype)


# ---------------------------------------------------------------------------
# Tile selection with padded-layout VMEM accounting
# ---------------------------------------------------------------------------
def _round_up(n, m):
    return ((n + m - 1) // m) * m


def _round_down8(n):
    return (n // 8) * 8


def _sublane_pad(rows, itemsize):
    """Second-last block dim pads to 8 * packing (8 f32, 16 bf16, 32 int8)."""
    pack = max(1, 4 // max(itemsize, 1))
    return _round_up(max(rows, 1), 8 * pack)


def _block_vmem_bytes(tile_b, tile_t, H, in_itemsize, out_itemsize,
                      acc_itemsize):
    """Padded VMEM footprint: double-buffered in/out blocks + accumulator."""
    h_pad = _round_up(H, 128)                                   # lane padding
    in_block = tile_b * _sublane_pad(tile_t, in_itemsize) * h_pad * in_itemsize
    acc_block = tile_b * 8 * h_pad * acc_itemsize
    out_block = _sublane_pad(tile_b, out_itemsize) * h_pad * out_itemsize
    return 2 * in_block + acc_block + 2 * out_block


@functools.lru_cache(maxsize=1)
def _vmem_budgets():
    """(data_budget_bytes, vmem_limit_cap_bytes), generation-aware."""
    phys = None
    try:
        phys = int(pltpu.get_tpu_info().vmem_capacity_bytes)
    except Exception:
        phys = None
    if phys is None or phys <= (64 << 20):
        # v7x-class (64 MiB per TC) or unknown: conservative.
        return 24 << 20, 48 << 20
    # 128 MiB parts (v5e / v6e): use most of physical VMEM.
    return 64 << 20, 96 << 20


def _select_tiles(B, T, H, in_itemsize, out_itemsize, acc_itemsize,
                  budget_bytes):
    """Pick (tile_b, tile_t) under a padded VMEM byte budget.

    (8,128) rule on the last two block dims:
      * input block (tile_b, tile_t, H): tile_t multiple of 8 or == T; H full.
      * output block (tile_b, H):        tile_b multiple of 8 or == B; H full.
    Batch axis uses a cdiv grid, so tile_b only needs to be a multiple of 8
    (or == B when B < 8); no divisibility of B required.
    """
    def fits(tb, tt):
        return _block_vmem_bytes(tb, tt, H, in_itemsize, out_itemsize,
                                 acc_itemsize) <= budget_bytes

    # T-tile candidates: multiples of 8 (or full T when T < 8); prefer long.
    if T < 8:
        tile_t_opts = [T]
    else:
        t_max = min(_round_down8(T), 2048)
        t_floor = min(t_max, 128)
        tile_t_opts = list(range(t_max, t_floor - 1, -8))

    # Batch-tile candidates: multiples of 8, cdiv grid handles the remainder.
    if B < 8:
        b_opts = [B]
    else:
        b_max = min(_round_down8(B), 1024)
        if B >= 16:
            # Keep >= 2 batch tiles so v7x's two TensorCores both stream.
            b_max = max(min(b_max, _round_down8(B // 2)), 8)
        b_opts = list(range(b_max, 7, -8))

    # Prefer longest T tile, then the largest batch tile that fits the budget.
    for tt in tile_t_opts:
        for tb in b_opts:
            if fits(tb, tt):
                return tb, tt

    # Degenerate fallback: smallest batch tile, shrink tile_t toward 8.
    tb = b_opts[-1]
    if T >= 8:
        for tt in range(tile_t_opts[-1], 7, -8):
            if fits(tb, tt):
                return tb, tt
        return tb, 8
    return tb, T


# ---------------------------------------------------------------------------
# Wrapper
# ---------------------------------------------------------------------------
def aggregation(x, reduction="mean", tile_b=None, tile_t=None):
    """Pallas implementation of Aggregation.forward (reduce over dim=1)."""
    B, T, H = x.shape
    if reduction not in ("mean", "sum", "max"):
        # default branch of the module: X[:, 0] — pure slice, no hot-path compute.
        return x[:, 0]

    in_itemsize = jnp.dtype(x.dtype).itemsize
    out_itemsize = in_itemsize
    is_float = jnp.issubdtype(x.dtype, jnp.floating)
    if is_float or reduction == "mean":
        acc_dtype = jnp.float32
        acc_init = float("-inf") if reduction == "max" else 0.0
    else:
        acc_dtype = jnp.int32
        acc_init = int(jnp.iinfo(jnp.int32).min) if reduction == "max" else 0
    acc_itemsize = jnp.dtype(acc_dtype).itemsize

    data_budget, limit_cap = _vmem_budgets()
    sel_tb, sel_tt = _select_tiles(B, T, H, in_itemsize, out_itemsize,
                                   acc_itemsize, data_budget)
    if tile_b is None:
        tile_b = sel_tb
    if tile_t is None:
        tile_t = sel_tt
    assert tile_b == B or tile_b % 8 == 0, tile_b
    assert tile_t <= T and (tile_t == T or tile_t % 8 == 0), tile_t

    chunked = (tile_t >= 8) and (tile_t % 8 == 0)
    need_mask = chunked and (T % tile_t != 0)
    acc_rows = 8 if chunked else 1
    n_chunks = tile_t // 8 if chunked else 1
    if chunked and n_chunks % 4 == 0:
        group = 4
    elif chunked and n_chunks % 2 == 0:
        group = 2
    else:
        group = 1

    grid = (pl.cdiv(B, tile_b), pl.cdiv(T, tile_t))

    # Explicit scoped-VMEM limit from padded usage (+ ~25% headroom), capped
    # by the generation-aware limit.
    vmem_used = _block_vmem_bytes(tile_b, tile_t, H, in_itemsize,
                                  out_itemsize, acc_itemsize)
    vmem_limit = int(min(max(vmem_used * 5 // 4 + (2 << 20), 16 << 20),
                         limit_cap))

    kernel = functools.partial(
        _agg_kernel, reduction=reduction, total_t=T, tile_t=tile_t,
        chunked=chunked, need_mask=need_mask, acc_init=acc_init, group=group)

    return pl.pallas_call(
        kernel,
        out_shape=jax.ShapeDtypeStruct((B, H), x.dtype),
        grid_spec=pltpu.PrefetchScalarGridSpec(
            num_scalar_prefetch=0,
            grid=grid,
            in_specs=[pl.BlockSpec((tile_b, tile_t, H),
                                   lambda b, t: (b, t, 0))],
            out_specs=pl.BlockSpec((tile_b, H), lambda b, t: (b, 0)),
            scratch_shapes=[pltpu.VMEM((tile_b, acc_rows, H), acc_dtype)],
        ),
        compiler_params=pltpu.CompilerParams(
            dimension_semantics=("parallel", "arbitrary"),
            vmem_limit_bytes=vmem_limit,
        ),
    )(x)


# ---------------------------------------------------------------------------
# Self-test
# ---------------------------------------------------------------------------
if __name__ == "__main__":
    key = jax.random.PRNGKey(0)
    B, T, H = 2, 8, 32
    x = jax.random.normal(key, (B, T, H), dtype=jnp.float32)

    # default reduction of the module is 'mean'
    out = jax.block_until_ready(aggregation(x, reduction="mean"))
    assert out.shape == (B, H)
    assert jnp.allclose(out, jnp.mean(x, axis=1), atol=1e-5, rtol=1e-5)

    out_sum = jax.block_until_ready(aggregation(x, reduction="sum"))
    assert jnp.allclose(out_sum, jnp.sum(x, axis=1), atol=1e-5, rtol=1e-5)

    out_max = jax.block_until_ready(aggregation(x, reduction="max"))
    assert jnp.allclose(out_max, jnp.max(x, axis=1), atol=1e-5, rtol=1e-5)

    out_first = jax.block_until_ready(aggregation(x, reduction="first"))
    assert jnp.allclose(out_first, x[:, 0])

    # ragged-T mask path (only the last T tile is masked)
    B2, T2, H2 = 2, 20, 32
    x2 = jax.random.normal(jax.random.PRNGKey(1), (B2, T2, H2),
                           dtype=jnp.float32)
    o2 = jax.block_until_ready(aggregation(x2, reduction="mean"))
    assert jnp.allclose(o2, jnp.mean(x2, axis=1), atol=1e-5, rtol=1e-5)
    o2m = jax.block_until_ready(aggregation(x2, reduction="max"))
    assert jnp.allclose(o2m, jnp.max(x2, axis=1), atol=1e-5, rtol=1e-5)

    # grouped-chunk path (n_chunks % 4 == 0)
    B3, T3, H3 = 2, 32, 32
    x3 = jax.random.normal(jax.random.PRNGKey(2), (B3, T3, H3),
                           dtype=jnp.float32)
    o3 = jax.block_until_ready(aggregation(x3, reduction="sum"))
    assert jnp.allclose(o3, jnp.sum(x3, axis=1), atol=1e-4, rtol=1e-5)

    # cdiv batch grid with a partial last batch tile (B not multiple of tile_b)
    B4, T4, H4 = 10, 40, 32
    x4 = jax.random.normal(jax.random.PRNGKey(3), (B4, T4, H4),
                           dtype=jnp.float32)
    o4 = jax.block_until_ready(aggregation(x4, reduction="mean"))
    assert jnp.allclose(o4, jnp.mean(x4, axis=1), atol=1e-5, rtol=1e-5)
    o4m = jax.block_until_ready(aggregation(x4, reduction="max"))
    assert jnp.allclose(o4m, jnp.max(x4, axis=1), atol=1e-5, rtol=1e-5)

    print("KERNEL_OK")
</pallas_src>

<mosaic_0001>
module attributes {stable_mosaic.version = 11 : i64} {
  func.func @_agg_kernel(%arg0: i32, %arg1: i32, %arg2: memref<2x8x32xf32, #tpu.memory_space<vmem>>, %arg3: memref<2x32xf32, #tpu.memory_space<vmem>>, %arg4: memref<2x8x32xf32, #tpu.memory_space<vmem>>) attributes {dimension_semantics = [#tpu.dimension_semantics<parallel>, #tpu.dimension_semantics<arbitrary>], iteration_bounds = array<i64: 1, 1>, scalar_prefetch = 0 : i64, scratch_operands = 1 : i64, tpu.core_type = #tpu.core_type<tc>, window_params = [{transform_indices = @transform_0, window_bounds = array<i64: 2, 8, 32>}, {transform_indices = @transform_1, window_bounds = array<i64: 2, 32>}]} {
    %c0_i32 = arith.constant 0 : i32
    %0 = arith.cmpi eq, %arg1, %c0_i32 : i32
    %1 = arith.extui %0 : i1 to i32
    %c0_i32_0 = arith.constant 0 : i32
    %2 = arith.cmpi ne, %1, %c0_i32_0 : i32
    scf.if %2 {
      %cst = arith.constant 0.000000e+00 : f32
      %14 = vector.broadcast %cst : f32 to vector<2x8x32xf32>
      %c0_12 = arith.constant 0 : index
      %c0_13 = arith.constant 0 : index
      %c0_14 = arith.constant 0 : index
      %15 = vector.load %arg4[%c0_12, %c0_13, %c0_14] : memref<2x8x32xf32, #tpu.memory_space<vmem>>, vector<2x8x32xf32>
      tpu.vector_store %arg4[%c0_12, %c0_13, %c0_14], %14 {strides = array<i32>} : memref<2x8x32xf32, #tpu.memory_space<vmem>>, vector<2x8x32xf32>,
    } else {
    }
    %c0_i32_1 = arith.constant 0 : i32
    %c8_i32 = arith.constant 8 : i32
    %3 = arith.muli %c0_i32_1, %c8_i32 : i32
    %c0_i32_2 = arith.constant 0 : i32
    %4 = arith.addi %3, %c0_i32_2 : i32
    %5 = tpu.assume_multiple %4, 8 : i32
    %c0 = arith.constant 0 : index
    %6 = arith.index_cast %5 : i32 to index
    %c0_3 = arith.constant 0 : index
    %7 = vector.load %arg2[%c0, %6, %c0_3] : memref<2x8x32xf32, #tpu.memory_space<vmem>>, vector<2x8x32xf32>
    %c0_4 = arith.constant 0 : index
    %c0_5 = arith.constant 0 : index
    %c0_6 = arith.constant 0 : index
    %8 = vector.load %arg4[%c0_4, %c0_5, %c0_6] : memref<2x8x32xf32, #tpu.memory_space<vmem>>, vector<2x8x32xf32>
    %9 = arith.addf %8, %7 : vector<2x8x32xf32>
    %c0_7 = arith.constant 0 : index
    %c0_8 = arith.constant 0 : index
    %c0_9 = arith.constant 0 : index
    %10 = vector.load %arg4[%c0_7, %c0_8, %c0_9] : memref<2x8x32xf32, #tpu.memory_space<vmem>>, vector<2x8x32xf32>
    tpu.vector_store %arg4[%c0_7, %c0_8, %c0_9], %9 {strides = array<i32>} : memref<2x8x32xf32, #tpu.memory_space<vmem>>, vector<2x8x32xf32>,
    %c1_i32 = arith.constant 1 : i32
    %c0_i32_10 = arith.constant 0 : i32
    %11 = arith.cmpi eq, %arg1, %c0_i32_10 : i32
    %12 = arith.extui %11 : i1 to i32
    %c0_i32_11 = arith.constant 0 : i32
    %13 = arith.cmpi ne, %12, %c0_i32_11 : i32
    scf.if %13 {
      %c0_12 = arith.constant 0 : index
      %c0_13 = arith.constant 0 : index
      %c0_14 = arith.constant 0 : index
      %14 = vector.load %arg4[%c0_12, %c0_13, %c0_14] : memref<2x8x32xf32, #tpu.memory_space<vmem>>, vector<2x8x32xf32>
      %cst = arith.constant dense<0.000000e+00> : vector<2x32xf32>
      %15 = vector.multi_reduction <add>, %14, %cst [1] : vector<2x8x32xf32> to vector<2x32xf32>
      %cst_15 = arith.constant 1.250000e-01 : f32
      %16 = vector.broadcast %cst_15 : f32 to vector<2x32xf32>
      %17 = arith.mulf %15, %16 : vector<2x32xf32>
      %c0_16 = arith.constant 0 : index
      %c0_17 = arith.constant 0 : index
      %18 = vector.load %arg3[%c0_16, %c0_17] : memref<2x32xf32, #tpu.memory_space<vmem>>, vector<2x32xf32>
      tpu.vector_store %arg3[%c0_16, %c0_17], %17 {strides = array<i32>} : memref<2x32xf32, #tpu.memory_space<vmem>>, vector<2x32xf32>,
    } else {
    }
    return
  }
  func.func @transform_0(%arg0: i32, %arg1: i32) -> (i32, i32, i32) {
    %c0_i32 = arith.constant 0 : i32
    %c0_i32_0 = arith.constant 0 : i32
    return %arg0, %arg1, %c0_i32 : i32, i32, i32
  }
  func.func @transform_1(%arg0: i32, %arg1: i32) -> (i32, i32) {
    %c0_i32 = arith.constant 0 : i32
    %c0_i32_0 = arith.constant 0 : i32
    return %arg0, %c0_i32 : i32, i32
  }
}

</mosaic_0001>

<llo_original>
// kernel: tpu_custom_call.1
$region0: #{tpu_custom_call.1}
  #allocation0 [shape = 'u32[]', space=smem, size = 0x4, offset = 0x4, fixed_abs, tag = 'smem constant byte address 0x4 - core index']
  #allocation1 [shape = 'u32[144,128]{1,0:T(1,128)}', space=vmem, size = 0x12000, scoped, tag = 'internal scratch']
  #allocation2 [shape = 'f32[2,8,32]{2,1,0:T(8,128)}', space=vmem, size = 0x2000, scoped, tag = 'scratch operand']
  %s0 = inlined_call_operand.hbm [shape: f32[2,8,32], index: 0, kind: input, shape index: {}]
  %s1 = inlined_call_operand.hbm [shape: f32[2,32], index: 1, kind: output, shape index: {}]
  %s2 = sld [smem:[#allocation0]]
  $region26: #{tpu_custom_call.1} parent=0
    _
  %s4 = ssub.s32 1, %s2
  %s5 = scalar_select 0, %s4, %s2
  $region1: #{tpu_custom_call.1} parent=0
    #allocation3 [shape = 'u8[8192]{0}', space=vmem, size = 0x2000, scoped, tag = 'input window, operand 0, single buffered']
    #allocation4 [shape = 's32[1]{0}', space=sflag, size = 0x4, scoped, tag = 'scoped memory for tpu_custom_call.1']
    #allocation5 [shape = 's32[1]{0}', space=sflag, size = 0x4, scoped, tag = 'scoped memory for tpu_custom_call.1']
    #allocation6 [shape = 'u8[1024]{0}', space=vmem, size = 0x400, scoped, tag = 'output window, operand 0, single buffered']
    %6 = vsyncpa [#allocation4], 0
    %7 = vsyncpa [#allocation5], 0
    // Predicated region
    $region2: #{tpu_custom_call.1} parent=1 // pred_check
      _
    $region3: #{tpu_custom_call.1} parent=1 // pred_check_branch
      %9 = sbr.rel (0) target = $region5
    $region4: #{tpu_custom_call.1} parent=1 // pred_region
      %s11 = ssub.s32 256, 256
      %12 = vsyncadd [#allocation4], %s11
      %s13 = sshll.u32 [#allocation3], 4
      %s14 = int_to_ptr.vmem [resolvable:$true] %s13
      %19 = dma.hbm_to_vmem [thread:$0]  %s0, 256, %s14, [#allocation4], 128, 128, 8
    $region5: #{tpu_custom_call.1} parent=1 // pred_fallthru
      _
    // Predicated region
    $region6: #{tpu_custom_call.1} parent=1 // pred_check
      _
    $region7: #{tpu_custom_call.1} parent=1 // pred_check_branch
      %21 = sbr.rel (0) target = $region9
    $region8: #{tpu_custom_call.1} parent=1 // pred_region
      %22 = dma.done [#allocation4], 256
    $region9: #{tpu_custom_call.1} parent=1 // pred_fallthru
      _
    %p23 = scmp.eq.s32.totalorder 0, 0
    // Predicated region
    $region10: #{tpu_custom_call.1} parent=1 // pred_check
      %p24 = pneg %p23
    $region11: #{tpu_custom_call.1} parent=1 // pred_check_branch
      %26 = sbr.rel (%p24) target = $region13
    $region12: #{tpu_custom_call.1} parent=1 // pred_region
      %vm27 = vcmask 261120
      %28 = vst.msk [vmem:[#allocation2] sm:$0xff] %vm27, 0.0
      %29 = vst.msk [vmem:[#allocation2 + $0x8] sm:$0xff] %vm27, 0.0
    $region13: #{tpu_custom_call.1} parent=1 // pred_fallthru
      _
    %v30 = vld [vmem:[#allocation3] sm:$0xff]
    %v31 = vld [vmem:[#allocation3 + $0x8] sm:$0xff]
    %v32 = vld [vmem:[#allocation2] sm:$0xff]
    %v33 = vld [vmem:[#allocation2 + $0x8] sm:$0xff]
    %v34 = vadd.f32 %v32, %v30
    %v35 = vadd.f32 %v33, %v31
    %vm36 = vcmask 261120
    %37 = vst.msk [vmem:[#allocation2] sm:$0xff] %vm36, %v34
    %38 = vst.msk [vmem:[#allocation2 + $0x8] sm:$0xff] %vm36, %v35
    // Predicated region
    $region14: #{tpu_custom_call.1} parent=1 // pred_check
      %p39 = pneg %p23
    $region15: #{tpu_custom_call.1} parent=1 // pred_check_branch
      %41 = sbr.rel (%p39) target = $region17
    $region16: #{tpu_custom_call.1} parent=1 // pred_region
      %v42 = vld [vmem:[#allocation2] sm:$0xff]
      %v43 = vld [vmem:[#allocation2 + $0x8] sm:$0xff]
      %v44 = vsel %vm36, %v42, 0.0
      %v45 = vrot.slane %v44, 4
      %v46 = vadd.f32 %v44, %v45
      %v47 = vrot.slane %v46, 2
      %v48 = vadd.f32 %v46, %v47
      %v49 = vrot.slane %v48, 1
      %v50 = vadd.f32 %v48, %v49
      %v51 = vsel %vm36, %v43, 0.0
      %v52 = vrot.slane %v51, 4
      %v53 = vadd.f32 %v51, %v52
      %v54 = vrot.slane %v53, 2
      %v55 = vadd.f32 %v53, %v54
      %v56 = vrot.slane %v55, 1
      %v57 = vadd.f32 %v55, %v56
      %v58 = vmul.f32 %v50, 0.125
      %v59 = vmul.f32 %v57, 0.125
      %vm62 = vcmask 1041409
      %v63 = vsel %vm62, %v59, %v58
      %vm65 = vcmask 254976
      %66 = vst.msk [vmem:[#allocation6] sm:$0x3] %vm65, %v63
    $region17: #{tpu_custom_call.1} parent=1 // pred_fallthru
      _
    // Predicated region
    $region18: #{tpu_custom_call.1} parent=1 // pred_check
      _
    $region19: #{tpu_custom_call.1} parent=1 // pred_check_branch
      %68 = sbr.rel (0) target = $region21
    $region20: #{tpu_custom_call.1} parent=1 // pred_region
      %s70 = ssub.s32 32, 32
      %71 = vsyncadd [#allocation5], %s70
      %s73 = sshll.u32 [#allocation6], 4
      %s74 = int_to_ptr.vmem [resolvable:$true] %s73
      %76 = dma.vmem_to_hbm [thread:$0]  %s74, 32, %s1, [#allocation5]
    $region21: #{tpu_custom_call.1} parent=1 // pred_fallthru
      _
    // Predicated region
    $region22: #{tpu_custom_call.1} parent=1 // pred_check
      _
    $region23: #{tpu_custom_call.1} parent=1 // pred_check_branch
      %78 = sbr.rel (0) target = $region25
    $region24: #{tpu_custom_call.1} parent=1 // pred_region
      %79 = dma.done [#allocation5], 32
    $region25: #{tpu_custom_call.1} parent=1 // pred_fallthru
      _
    %80 = vsyncpa [#allocation4], 1
    %81 = vsyncpa [#allocation5], 1

</llo_original>
